<compile_context>
chip_gen: v5e
topology: v5e:2x2
jax: 0.10.0
libtpu: 0.0.40
codegen_flags: <defaults>
</compile_context>

<pallas_src>
import functools

import jax
import jax.numpy as jnp
from jax.experimental import pallas as pl
from jax.experimental.pallas import tpu as pltpu


def _fused_attn_kernel(xq_ref, xkv_ref, wq_ref, wk_ref, wv_ref, wo_ref, b_ref,
                       o_ref, q_s, m_s, l_s, acc_s, o_acc, *, scale, block_kv):
    """grid = (batch, head, kv_block); fused QKV proj + flash attn + fc_out."""
    h = pl.program_id(1)                      # head index (reduction for output)
    j = pl.program_id(2)                      # kv-block index (reduction)

    # Initialize the cross-head output accumulator with the fc_out bias.
    @pl.when(jnp.logical_and(h == 0, j == 0))
    def _init_out():
        o_acc[...] = jnp.broadcast_to(b_ref[...], o_acc.shape)

    @pl.when(j == 0)
    def _init_head():
        # Per-head Q projection (x @ WqT_head), scale folded in, bf16 for MXU.
        x = xq_ref[0]                                            # (T, C) bf16
        q = jax.lax.dot_general(x, wq_ref[0], (((1,), (0,)), ((), ())),
                                preferred_element_type=jnp.float32)  # (T, D)
        q_s[...] = (q * scale).astype(jnp.bfloat16)
        m_s[...] = jnp.full_like(m_s, -jnp.inf)
        l_s[...] = jnp.zeros_like(l_s)
        acc_s[...] = jnp.zeros_like(acc_s)

    # Per-head K / V projections for the current KV block.
    xkv = xkv_ref[0]                                             # (Bkv, C) bf16
    k = jax.lax.dot_general(xkv, wk_ref[0], (((1,), (0,)), ((), ())),
                            preferred_element_type=jnp.float32)  # (Bkv, D)
    v = jax.lax.dot_general(xkv, wv_ref[0], (((1,), (0,)), ((), ())),
                            preferred_element_type=jnp.float32)  # (Bkv, D)

    # Scores (T, Bkv) = q @ k^T -- contract head_dim of both (no transpose).
    s = jax.lax.dot_general(q_s[...], k.astype(jnp.bfloat16),
                            (((1,), (1,)), ((), ())),
                            preferred_element_type=jnp.float32)

    # Causal mask with a finite sentinel (avoids inf/NaN corner cases).
    tq = s.shape[0]
    row = jax.lax.broadcasted_iota(jnp.int32, (tq, block_kv), 0)
    col = jax.lax.broadcasted_iota(jnp.int32, (tq, block_kv), 1) + j * block_kv
    s = jnp.where(col <= row, s, -1e30)

    # Online softmax (deferred normalization).
    m_prev = m_s[...]                                            # (T, 1)
    m_new = jnp.maximum(m_prev, jnp.max(s, axis=-1, keepdims=True))
    alpha = jnp.exp(m_prev - m_new)
    p = jnp.exp(s - m_new)                                       # (T, Bkv) f32
    l_s[...] = alpha * l_s[...] + jnp.sum(p, axis=-1, keepdims=True)
    acc_s[...] = alpha * acc_s[...] + jax.lax.dot_general(
        p.astype(jnp.bfloat16), v.astype(jnp.bfloat16),
        (((1,), (0,)), ((), ())), preferred_element_type=jnp.float32)
    m_s[...] = m_new

    @pl.when(j == pl.num_programs(2) - 1)
    def _finish_head():
        # Normalize this head's context and fold in its slice of fc_out.
        inv_l = pl.reciprocal(l_s[...], approx=True)             # EUP, ~free
        ctx = (acc_s[...] * inv_l).astype(jnp.bfloat16)          # (T, D)
        o_acc[...] += jax.lax.dot_general(
            ctx, wo_ref[0], (((1,), (0,)), ((), ())),
            preferred_element_type=jnp.float32)                  # (T, C)

        @pl.when(h == pl.num_programs(1) - 1)
        def _write():
            o_ref[0] = o_acc[...].astype(o_ref.dtype)


def causal_self_attention(x, wq, wk, wv, wo, bo, *, n_head, block_kv=None):
    N, T, C = x.shape
    D = C // n_head
    assert D * n_head == C, "embed_dim must be divisible by n_head"
    if block_kv is None:
        block_kv = T if T <= 128 else 128
    assert T % block_kv == 0 and (block_kv == T or block_kv % 8 == 0)
    num_kv = T // block_kv
    scale = 1.0 / (C ** 0.5)   # module scales by sqrt(embed_dim) (intentional)

    cdt = jnp.bfloat16
    xb = x.astype(cdt)

    # PyTorch Linear does y = x @ W.T: pre-transpose ONCE host-side so no
    # transposes happen in-kernel, and split per head so each grid step only
    # stages a small per-head weight slice in VMEM.
    def head_major_in(w):              # (C, C) -> (H, C, D)  columns of W^T
        return jnp.transpose(w).reshape(C, n_head, D).transpose(1, 0, 2).astype(cdt)

    wq3, wk3, wv3 = head_major_in(wq), head_major_in(wk), head_major_in(wv)
    wo3 = jnp.transpose(wo).reshape(n_head, D, C).astype(cdt)   # (H, D, C) rows of Wo^T
    bo2 = bo.reshape(1, C).astype(jnp.float32)

    kernel = functools.partial(_fused_attn_kernel, scale=scale, block_kv=block_kv)

    flops = 8 * N * T * C * C + 4 * N * T * T * C + N * T * C
    trans = N * n_head * T * T
    bytes_accessed = (2 * (N * T * C + N * n_head * T * C + 4 * C * C)
                      + 4 * (C + N * T * C))

    y = pl.pallas_call(
        kernel,
        out_shape=jax.ShapeDtypeStruct((N, T, C), x.dtype),
        grid_spec=pltpu.PrefetchScalarGridSpec(
            num_scalar_prefetch=0,
            grid=(N, n_head, num_kv),
            in_specs=[
                pl.BlockSpec((1, T, C), lambda n, h, j: (n, 0, 0)),         # x (queries, resident per n)
                pl.BlockSpec((1, block_kv, C), lambda n, h, j: (n, j, 0)),  # x (keys/values stream)
                pl.BlockSpec((1, C, D), lambda n, h, j: (h, 0, 0)),         # WqT head slice
                pl.BlockSpec((1, C, D), lambda n, h, j: (h, 0, 0)),         # WkT head slice
                pl.BlockSpec((1, C, D), lambda n, h, j: (h, 0, 0)),         # WvT head slice
                pl.BlockSpec((1, D, C), lambda n, h, j: (h, 0, 0)),         # WoT head slice
                pl.BlockSpec((1, C), lambda n, h, j: (0, 0)),               # fc_out bias
            ],
            out_specs=pl.BlockSpec((1, T, C), lambda n, h, j: (n, 0, 0)),
            scratch_shapes=[
                pltpu.VMEM((T, D), cdt),          # q (scaled, bf16)
                pltpu.VMEM((T, 1), jnp.float32),  # running max m
                pltpu.VMEM((T, 1), jnp.float32),  # running sum l
                pltpu.VMEM((T, D), jnp.float32),  # per-head context accumulator
                pltpu.VMEM((T, C), jnp.float32),  # cross-head fc_out accumulator
            ]),
        compiler_params=pltpu.CompilerParams(
            dimension_semantics=("parallel", "arbitrary", "arbitrary"),
            vmem_limit_bytes=64 * 1024 * 1024),
        cost_estimate=pl.CostEstimate(
            flops=flops, transcendentals=trans, bytes_accessed=bytes_accessed),
    )(xb, xb, wq3, wk3, wv3, wo3, bo2)
    return y


def _reference(x, wq, wk, wv, wo, bo, *, n_head):
    # Pure-JAX f32 reference mirroring the PyTorch forward (eval mode).
    N, T, C = x.shape
    D = C // n_head
    q = (x @ wq.T).reshape(N, T, n_head, D).transpose(0, 2, 1, 3)
    k = (x @ wk.T).reshape(N, T, n_head, D).transpose(0, 2, 1, 3)
    v = (x @ wv.T).reshape(N, T, n_head, D).transpose(0, 2, 1, 3)
    energy = (q @ jnp.swapaxes(k, -1, -2)) / (C ** 0.5)
    mask = jnp.tril(jnp.ones((T, T)))[None, None]
    energy = jnp.where(mask == 0, -jnp.inf, energy)
    attn = jax.nn.softmax(energy, axis=-1)
    out = (attn @ v).transpose(0, 2, 1, 3).reshape(N, T, C)
    return out @ wo.T + bo


if __name__ == "__main__":
    # Small config: embed_dim=32, n_head=4, seq=16, batch=2; block_kv=8 so
    # the flash accumulation path (2 KV blocks + cross-block causal mask)
    # and the cross-head fc_out accumulation are actually exercised.
    N, T, C, H = 2, 16, 32, 4

    key = jax.random.PRNGKey(0)
    kx, kq, kk, kv, ko, kb = jax.random.split(key, 6)

    def bf16_round(a):  # keep kernel (bf16 MXU) and f32 reference comparable
        return a.astype(jnp.bfloat16).astype(jnp.float32)

    x  = bf16_round(jax.random.normal(kx, (N, T, C), dtype=jnp.float32))
    wq = bf16_round(jax.random.normal(kq, (C, C), dtype=jnp.float32) * 0.05)
    wk = bf16_round(jax.random.normal(kk, (C, C), dtype=jnp.float32) * 0.05)
    wv = bf16_round(jax.random.normal(kv, (C, C), dtype=jnp.float32) * 0.05)
    wo = bf16_round(jax.random.normal(ko, (C, C), dtype=jnp.float32) * 0.05)
    bo = bf16_round(jax.random.normal(kb, (C,), dtype=jnp.float32) * 0.05)

    y = causal_self_attention(x, wq, wk, wv, wo, bo, n_head=H, block_kv=8)
    y = jax.block_until_ready(y)

    y_ref = _reference(x, wq, wk, wv, wo, bo, n_head=H)
    assert jnp.allclose(y, y_ref, atol=2e-2, rtol=2e-2), "mismatch vs reference"
    print("KERNEL_OK")
</pallas_src>

<mosaic_0001>
module attributes {stable_mosaic.version = 11 : i64} {
  func.func @_fused_attn_kernel(%arg0: i32, %arg1: i32, %arg2: i32, %arg3: memref<1x16x32xbf16, #tpu.memory_space<vmem>>, %arg4: memref<1x8x32xbf16, #tpu.memory_space<vmem>>, %arg5: memref<1x32x8xbf16, #tpu.memory_space<vmem>>, %arg6: memref<1x32x8xbf16, #tpu.memory_space<vmem>>, %arg7: memref<1x32x8xbf16, #tpu.memory_space<vmem>>, %arg8: memref<1x8x32xbf16, #tpu.memory_space<vmem>>, %arg9: memref<1x32xf32, #tpu.memory_space<vmem>>, %arg10: memref<1x16x32xf32, #tpu.memory_space<vmem>>, %arg11: memref<16x8xbf16, #tpu.memory_space<vmem>>, %arg12: memref<16x1xf32, #tpu.memory_space<vmem>>, %arg13: memref<16x1xf32, #tpu.memory_space<vmem>>, %arg14: memref<16x8xf32, #tpu.memory_space<vmem>>, %arg15: memref<16x32xf32, #tpu.memory_space<vmem>>) attributes {dimension_semantics = [#tpu.dimension_semantics<parallel>, #tpu.dimension_semantics<arbitrary>, #tpu.dimension_semantics<arbitrary>], iteration_bounds = array<i64: 2, 4, 2>, scalar_prefetch = 0 : i64, scratch_operands = 5 : i64, tpu.core_type = #tpu.core_type<tc>, window_params = [{transform_indices = @transform_0, window_bounds = array<i64: 1, 16, 32>}, {transform_indices = @transform_1, window_bounds = array<i64: 1, 8, 32>}, {transform_indices = @transform_2, window_bounds = array<i64: 1, 32, 8>}, {transform_indices = @transform_3, window_bounds = array<i64: 1, 32, 8>}, {transform_indices = @transform_4, window_bounds = array<i64: 1, 32, 8>}, {transform_indices = @transform_5, window_bounds = array<i64: 1, 8, 32>}, {pipeline_mode = #tpu.pipeline_mode<synchronous>, transform_indices = @transform_6, window_bounds = array<i64: 1, 32>}, {transform_indices = @transform_7, window_bounds = array<i64: 1, 16, 32>}]} {
    %c0_i32 = arith.constant 0 : i32
    %0 = arith.cmpi eq, %arg1, %c0_i32 : i32
    %c0_i32_0 = arith.constant 0 : i32
    %1 = arith.cmpi eq, %arg2, %c0_i32_0 : i32
    %2 = arith.andi %0, %1 : i1
    %3 = arith.extui %2 : i1 to i32
    %c0_i32_1 = arith.constant 0 : i32
    %4 = arith.cmpi ne, %3, %c0_i32_1 : i32
    scf.if %4 {
      %c0_33 = arith.constant 0 : index
      %c0_34 = arith.constant 0 : index
      %54 = vector.load %arg9[%c0_33, %c0_34] : memref<1x32xf32, #tpu.memory_space<vmem>>, vector<1x32xf32>
      %55 = vector.shape_cast %54 : vector<1x32xf32> to vector<1x32xf32>
      %56 = vector.broadcast %55 : vector<1x32xf32> to vector<16x32xf32>
      %c0_35 = arith.constant 0 : index
      %c0_36 = arith.constant 0 : index
      %57 = vector.load %arg15[%c0_35, %c0_36] : memref<16x32xf32, #tpu.memory_space<vmem>>, vector<16x32xf32>
      tpu.vector_store %arg15[%c0_35, %c0_36], %56 {strides = array<i32>} : memref<16x32xf32, #tpu.memory_space<vmem>>, vector<16x32xf32>,
    } else {
    }
    %c0_i32_2 = arith.constant 0 : i32
    %5 = arith.cmpi eq, %arg2, %c0_i32_2 : i32
    %6 = arith.extui %5 : i1 to i32
    %c0_i32_3 = arith.constant 0 : i32
    %7 = arith.cmpi ne, %6, %c0_i32_3 : i32
    scf.if %7 {
      %c0_33 = arith.constant 0 : index
      %c0_34 = arith.constant 0 : index
      %c0_35 = arith.constant 0 : index
      %54 = vector.load %arg3[%c0_33, %c0_34, %c0_35] : memref<1x16x32xbf16, #tpu.memory_space<vmem>>, vector<1x16x32xbf16>
      %55 = vector.shape_cast %54 : vector<1x16x32xbf16> to vector<16x32xbf16>
      %c0_36 = arith.constant 0 : index
      %c0_37 = arith.constant 0 : index
      %c0_38 = arith.constant 0 : index
      %56 = vector.load %arg5[%c0_36, %c0_37, %c0_38] : memref<1x32x8xbf16, #tpu.memory_space<vmem>>, vector<1x32x8xbf16>
      %57 = vector.shape_cast %56 : vector<1x32x8xbf16> to vector<32x8xbf16>
      %cst_39 = arith.constant dense<0.000000e+00> : vector<16x8xf32>
      %58 = tpu.matmul %55, %57, %cst_39 {dimension_numbers = #tpu.dot_dimension_numbers<[1], [0], [0], [1], [0, 0, 1, 1], [], []>} : vector<16x32xbf16>, vector<32x8xbf16>, vector<16x8xf32> -> vector<16x8xf32>
      %cst_40 = arith.constant 0.176776692 : f32
      %59 = vector.broadcast %cst_40 : f32 to vector<16x8xf32>
      %60 = arith.mulf %58, %59 : vector<16x8xf32>
      %61 = arith.truncf %60 : vector<16x8xf32> to vector<16x8xbf16>
      %c0_41 = arith.constant 0 : index
      %c0_42 = arith.constant 0 : index
      %62 = vector.load %arg11[%c0_41, %c0_42] : memref<16x8xbf16, #tpu.memory_space<vmem>>, vector<16x8xbf16>
      tpu.vector_store %arg11[%c0_41, %c0_42], %61 {strides = array<i32>} : memref<16x8xbf16, #tpu.memory_space<vmem>>, vector<16x8xbf16>,
      %cst_43 = arith.constant 0xFF800000 : f32
      %63 = vector.broadcast %cst_43 : f32 to vector<16x1xf32>
      %c0_44 = arith.constant 0 : index
      %c0_45 = arith.constant 0 : index
      %64 = vector.load %arg12[%c0_44, %c0_45] : memref<16x1xf32, #tpu.memory_space<vmem>>, vector<16x1xf32>
      tpu.vector_store %arg12[%c0_44, %c0_45], %63 {strides = array<i32>} : memref<16x1xf32, #tpu.memory_space<vmem>>, vector<16x1xf32>,
      %cst_46 = arith.constant 0.000000e+00 : f32
      %65 = vector.broadcast %cst_46 : f32 to vector<16x1xf32>
      %c0_47 = arith.constant 0 : index
      %c0_48 = arith.constant 0 : index
      %66 = vector.load %arg13[%c0_47, %c0_48] : memref<16x1xf32, #tpu.memory_space<vmem>>, vector<16x1xf32>
      tpu.vector_store %arg13[%c0_47, %c0_48], %65 {strides = array<i32>} : memref<16x1xf32, #tpu.memory_space<vmem>>, vector<16x1xf32>,
      %cst_49 = arith.constant 0.000000e+00 : f32
      %67 = vector.broadcast %cst_49 : f32 to vector<16x8xf32>
      %c0_50 = arith.constant 0 : index
      %c0_51 = arith.constant 0 : index
      %68 = vector.load %arg14[%c0_50, %c0_51] : memref<16x8xf32, #tpu.memory_space<vmem>>, vector<16x8xf32>
      tpu.vector_store %arg14[%c0_50, %c0_51], %67 {strides = array<i32>} : memref<16x8xf32, #tpu.memory_space<vmem>>, vector<16x8xf32>,
    } else {
    }
    %c0 = arith.constant 0 : index
    %c0_4 = arith.constant 0 : index
    %c0_5 = arith.constant 0 : index
    %8 = vector.load %arg4[%c0, %c0_4, %c0_5] : memref<1x8x32xbf16, #tpu.memory_space<vmem>>, vector<1x8x32xbf16>
    %9 = vector.shape_cast %8 : vector<1x8x32xbf16> to vector<8x32xbf16>
    %c0_6 = arith.constant 0 : index
    %c0_7 = arith.constant 0 : index
    %c0_8 = arith.constant 0 : index
    %10 = vector.load %arg6[%c0_6, %c0_7, %c0_8] : memref<1x32x8xbf16, #tpu.memory_space<vmem>>, vector<1x32x8xbf16>
    %11 = vector.shape_cast %10 : vector<1x32x8xbf16> to vector<32x8xbf16>
    %cst = arith.constant dense<0.000000e+00> : vector<8x8xf32>
    %12 = tpu.matmul %9, %11, %cst {dimension_numbers = #tpu.dot_dimension_numbers<[1], [0], [0], [1], [0, 0, 1, 1], [], []>} : vector<8x32xbf16>, vector<32x8xbf16>, vector<8x8xf32> -> vector<8x8xf32>
    %c0_9 = arith.constant 0 : index
    %c0_10 = arith.constant 0 : index
    %c0_11 = arith.constant 0 : index
    %13 = vector.load %arg7[%c0_9, %c0_10, %c0_11] : memref<1x32x8xbf16, #tpu.memory_space<vmem>>, vector<1x32x8xbf16>
    %14 = vector.shape_cast %13 : vector<1x32x8xbf16> to vector<32x8xbf16>
    %cst_12 = arith.constant dense<0.000000e+00> : vector<8x8xf32>
    %15 = tpu.matmul %9, %14, %cst_12 {dimension_numbers = #tpu.dot_dimension_numbers<[1], [0], [0], [1], [0, 0, 1, 1], [], []>} : vector<8x32xbf16>, vector<32x8xbf16>, vector<8x8xf32> -> vector<8x8xf32>
    %c0_13 = arith.constant 0 : index
    %c0_14 = arith.constant 0 : index
    %16 = vector.load %arg11[%c0_13, %c0_14] : memref<16x8xbf16, #tpu.memory_space<vmem>>, vector<16x8xbf16>
    %17 = arith.truncf %12 : vector<8x8xf32> to vector<8x8xbf16>
    %cst_15 = arith.constant dense<0.000000e+00> : vector<16x8xf32>
    %18 = tpu.matmul %16, %17, %cst_15 {dimension_numbers = #tpu.dot_dimension_numbers<[1], [1], [0], [0], [0, 0, 1, 0], [], []>} : vector<16x8xbf16>, vector<8x8xbf16>, vector<16x8xf32> -> vector<16x8xf32>
    %19 = tpu.iota {dimensions = array<i32: 0>} : vector<16x8xi32>
    %20 = tpu.iota {dimensions = array<i32: 1>} : vector<16x8xi32>
    %c8_i32 = arith.constant 8 : i32
    %21 = arith.muli %arg2, %c8_i32 : i32
    %22 = vector.broadcast %21 : i32 to vector<16x8xi32>
    %23 = arith.addi %20, %22 : vector<16x8xi32>
    %24 = arith.cmpi sle, %23, %19 : vector<16x8xi32>
    %cst_16 = arith.constant -1.000000e+30 : f32
    %25 = vector.broadcast %cst_16 : f32 to vector<16x8xf32>
    %26 = arith.select %24, %18, %25 : vector<16x8xi1>, vector<16x8xf32>
    %c0_17 = arith.constant 0 : index
    %c0_18 = arith.constant 0 : index
    %27 = vector.load %arg12[%c0_17, %c0_18] : memref<16x1xf32, #tpu.memory_space<vmem>>, vector<16x1xf32>
    %cst_19 = arith.constant dense<0xFF800000> : vector<16xf32>
    %28 = vector.multi_reduction <maximumf>, %26, %cst_19 [1] : vector<16x8xf32> to vector<16xf32>
    %29 = vector.shape_cast %28 : vector<16xf32> to vector<16x1xf32>
    %30 = arith.maximumf %27, %29 : vector<16x1xf32>
    %31 = arith.subf %27, %30 : vector<16x1xf32>
    %32 = math.exp %31 : vector<16x1xf32>
    %33 = vector.broadcast %30 : vector<16x1xf32> to vector<16x8xf32>
    %34 = arith.subf %26, %33 : vector<16x8xf32>
    %35 = math.exp %34 : vector<16x8xf32>
    %c0_20 = arith.constant 0 : index
    %c0_21 = arith.constant 0 : index
    %36 = vector.load %arg13[%c0_20, %c0_21] : memref<16x1xf32, #tpu.memory_space<vmem>>, vector<16x1xf32>
    %37 = arith.mulf %32, %36 : vector<16x1xf32>
    %cst_22 = arith.constant dense<0.000000e+00> : vector<16xf32>
    %38 = vector.multi_reduction <add>, %35, %cst_22 [1] : vector<16x8xf32> to vector<16xf32>
    %39 = vector.shape_cast %38 : vector<16xf32> to vector<16x1xf32>
    %40 = arith.addf %37, %39 : vector<16x1xf32>
    %c0_23 = arith.constant 0 : index
    %c0_24 = arith.constant 0 : index
    %41 = vector.load %arg13[%c0_23, %c0_24] : memref<16x1xf32, #tpu.memory_space<vmem>>, vector<16x1xf32>
    tpu.vector_store %arg13[%c0_23, %c0_24], %40 {strides = array<i32>} : memref<16x1xf32, #tpu.memory_space<vmem>>, vector<16x1xf32>,
    %c0_25 = arith.constant 0 : index
    %c0_26 = arith.constant 0 : index
    %42 = vector.load %arg14[%c0_25, %c0_26] : memref<16x8xf32, #tpu.memory_space<vmem>>, vector<16x8xf32>
    %43 = vector.broadcast %32 : vector<16x1xf32> to vector<16x8xf32>
    %44 = arith.mulf %43, %42 : vector<16x8xf32>
    %45 = arith.truncf %35 : vector<16x8xf32> to vector<16x8xbf16>
    %46 = arith.truncf %15 : vector<8x8xf32> to vector<8x8xbf16>
    %cst_27 = arith.constant dense<0.000000e+00> : vector<16x8xf32>
    %47 = tpu.matmul %45, %46, %cst_27 {dimension_numbers = #tpu.dot_dimension_numbers<[1], [0], [0], [1], [0, 0, 1, 1], [], []>} : vector<16x8xbf16>, vector<8x8xbf16>, vector<16x8xf32> -> vector<16x8xf32>
    %48 = arith.addf %44, %47 : vector<16x8xf32>
    %c0_28 = arith.constant 0 : index
    %c0_29 = arith.constant 0 : index
    %49 = vector.load %arg14[%c0_28, %c0_29] : memref<16x8xf32, #tpu.memory_space<vmem>>, vector<16x8xf32>
    tpu.vector_store %arg14[%c0_28, %c0_29], %48 {strides = array<i32>} : memref<16x8xf32, #tpu.memory_space<vmem>>, vector<16x8xf32>,
    %c0_30 = arith.constant 0 : index
    %c0_31 = arith.constant 0 : index
    %50 = vector.load %arg12[%c0_30, %c0_31] : memref<16x1xf32, #tpu.memory_space<vmem>>, vector<16x1xf32>
    tpu.vector_store %arg12[%c0_30, %c0_31], %30 {strides = array<i32>} : memref<16x1xf32, #tpu.memory_space<vmem>>, vector<16x1xf32>,
    %c1_i32 = arith.constant 1 : i32
    %51 = arith.cmpi eq, %arg2, %c1_i32 : i32
    %52 = arith.extui %51 : i1 to i32
    %c0_i32_32 = arith.constant 0 : i32
    %53 = arith.cmpi ne, %52, %c0_i32_32 : i32
    scf.if %53 {
      %c0_33 = arith.constant 0 : index
      %c0_34 = arith.constant 0 : index
      %54 = vector.load %arg13[%c0_33, %c0_34] : memref<16x1xf32, #tpu.memory_space<vmem>>, vector<16x1xf32>
      %55 = tpu.reciprocal %54 {approx = true} : vector<16x1xf32> -> vector<16x1xf32>
      %c0_35 = arith.constant 0 : index
      %c0_36 = arith.constant 0 : index
      %56 = vector.load %arg14[%c0_35, %c0_36] : memref<16x8xf32, #tpu.memory_space<vmem>>, vector<16x8xf32>
      %57 = vector.broadcast %55 : vector<16x1xf32> to vector<16x8xf32>
      %58 = arith.mulf %56, %57 : vector<16x8xf32>
      %59 = arith.truncf %58 : vector<16x8xf32> to vector<16x8xbf16>
      %c0_37 = arith.constant 0 : index
      %c0_38 = arith.constant 0 : index
      %60 = vector.load %arg15[%c0_37, %c0_38] : memref<16x32xf32, #tpu.memory_space<vmem>>, vector<16x32xf32>
      %c0_39 = arith.constant 0 : index
      %c0_40 = arith.constant 0 : index
      %c0_41 = arith.constant 0 : index
      %61 = vector.load %arg8[%c0_39, %c0_40, %c0_41] : memref<1x8x32xbf16, #tpu.memory_space<vmem>>, vector<1x8x32xbf16>
      %62 = vector.shape_cast %61 : vector<1x8x32xbf16> to vector<8x32xbf16>
      %cst_42 = arith.constant dense<0.000000e+00> : vector<16x32xf32>
      %63 = tpu.matmul %59, %62, %cst_42 {dimension_numbers = #tpu.dot_dimension_numbers<[1], [0], [0], [1], [0, 0, 1, 1], [], []>} : vector<16x8xbf16>, vector<8x32xbf16>, vector<16x32xf32> -> vector<16x32xf32>
      %64 = arith.addf %60, %63 : vector<16x32xf32>
      %c0_43 = arith.constant 0 : index
      %c0_44 = arith.constant 0 : index
      %65 = vector.load %arg15[%c0_43, %c0_44] : memref<16x32xf32, #tpu.memory_space<vmem>>, vector<16x32xf32>
      tpu.vector_store %arg15[%c0_43, %c0_44], %64 {strides = array<i32>} : memref<16x32xf32, #tpu.memory_space<vmem>>, vector<16x32xf32>,
      %c3_i32 = arith.constant 3 : i32
      %66 = arith.cmpi eq, %arg1, %c3_i32 : i32
      %67 = arith.extui %66 : i1 to i32
      %c0_i32_45 = arith.constant 0 : i32
      %68 = arith.cmpi ne, %67, %c0_i32_45 : i32
      scf.if %68 {
        %c0_46 = arith.constant 0 : index
        %c0_47 = arith.constant 0 : index
        %69 = vector.load %arg15[%c0_46, %c0_47] : memref<16x32xf32, #tpu.memory_space<vmem>>, vector<16x32xf32>
        %c0_48 = arith.constant 0 : index
        %c0_49 = arith.constant 0 : index
        %c0_50 = arith.constant 0 : index
        %70 = vector.load %arg10[%c0_48, %c0_49, %c0_50] : memref<1x16x32xf32, #tpu.memory_space<vmem>>, vector<1x16x32xf32>
        %71 = vector.shape_cast %70 : vector<1x16x32xf32> to vector<16x32xf32>
        %72 = vector.shape_cast %69 : vector<16x32xf32> to vector<1x16x32xf32>
        tpu.vector_store %arg10[%c0_48, %c0_49, %c0_50], %72 {strides = array<i32>} : memref<1x16x32xf32, #tpu.memory_space<vmem>>, vector<1x16x32xf32>,
      } else {
      }
    } else {
    }
    return
  }
  func.func @transform_0(%arg0: i32, %arg1: i32, %arg2: i32) -> (i32, i32, i32) {
    %c0_i32 = arith.constant 0 : i32
    %c0_i32_0 = arith.constant 0 : i32
    %c0_i32_1 = arith.constant 0 : i32
    return %arg0, %c0_i32, %c0_i32_0 : i32, i32, i32
  }
  func.func @transform_1(%arg0: i32, %arg1: i32, %arg2: i32) -> (i32, i32, i32) {
    %c0_i32 = arith.constant 0 : i32
    %c0_i32_0 = arith.constant 0 : i32
    return %arg0, %arg2, %c0_i32 : i32, i32, i32
  }
  func.func @transform_2(%arg0: i32, %arg1: i32, %arg2: i32) -> (i32, i32, i32) {
    %c0_i32 = arith.constant 0 : i32
    %c0_i32_0 = arith.constant 0 : i32
    %c0_i32_1 = arith.constant 0 : i32
    return %arg1, %c0_i32, %c0_i32_0 : i32, i32, i32
  }
  func.func @transform_3(%arg0: i32, %arg1: i32, %arg2: i32) -> (i32, i32, i32) {
    %c0_i32 = arith.constant 0 : i32
    %c0_i32_0 = arith.constant 0 : i32
    %c0_i32_1 = arith.constant 0 : i32
    return %arg1, %c0_i32, %c0_i32_0 : i32, i32, i32
  }
  func.func @transform_4(%arg0: i32, %arg1: i32, %arg2: i32) -> (i32, i32, i32) {
    %c0_i32 = arith.constant 0 : i32
    %c0_i32_0 = arith.constant 0 : i32
    %c0_i32_1 = arith.constant 0 : i32
    return %arg1, %c0_i32, %c0_i32_0 : i32, i32, i32
  }
  func.func @transform_5(%arg0: i32, %arg1: i32, %arg2: i32) -> (i32, i32, i32) {
    %c0_i32 = arith.constant 0 : i32
    %c0_i32_0 = arith.constant 0 : i32
    %c0_i32_1 = arith.constant 0 : i32
    return %arg1, %c0_i32, %c0_i32_0 : i32, i32, i32
  }
  func.func @transform_6(%arg0: i32, %arg1: i32, %arg2: i32) -> (i32, i32) {
    %c0_i32 = arith.constant 0 : i32
    %c0_i32_0 = arith.constant 0 : i32
    %c0_i32_1 = arith.constant 0 : i32
    return %c0_i32, %c0_i32_0 : i32, i32
  }
  func.func @transform_7(%arg0: i32, %arg1: i32, %arg2: i32) -> (i32, i32, i32) {
    %c0_i32 = arith.constant 0 : i32
    %c0_i32_0 = arith.constant 0 : i32
    %c0_i32_1 = arith.constant 0 : i32
    return %arg0, %c0_i32, %c0_i32_0 : i32, i32, i32
  }
}

</mosaic_0001>

<llo_original>
// kernel: tpu_custom_call.1
$region0: #{tpu_custom_call.1}
  #allocation0 [shape = 'u32[]', space=smem, size = 0x4, offset = 0x4, fixed_abs, tag = 'smem constant byte address 0x4 - core index']
  #allocation1 [shape = 'u32[72,128]{1,0:T(1,128)}', space=vmem, size = 0x9000, scoped, tag = 'internal scratch']
  #allocation2 [shape = 'bf16[16,8]{1,0:T(8,128)(2,1)}', space=vmem, size = 0x1000, scoped, tag = 'scratch operand']
  #allocation3 [shape = 'f32[16,1]{1,0:T(8,128)}', space=vmem, size = 0x2000, scoped, tag = 'scratch operand']
  #allocation4 [shape = 'f32[16,1]{1,0:T(8,128)}', space=vmem, size = 0x2000, scoped, tag = 'scratch operand']
  #allocation5 [shape = 'f32[16,8]{1,0:T(8,128)}', space=vmem, size = 0x2000, scoped, tag = 'scratch operand']
  #allocation6 [shape = 'f32[16,32]{1,0:T(8,128)}', space=vmem, size = 0x2000, scoped, tag = 'scratch operand']
  %s0 = inlined_call_operand.vmem [shape: bf16[2,16,32], index: 0, kind: input, shape index: {}]
  %s1 = inlined_call_operand.vmem [shape: bf16[2,16,32], index: 1, kind: input, shape index: {}]
  %s2 = inlined_call_operand.vmem [shape: bf16[4,32,8], index: 2, kind: input, shape index: {}]
  %s3 = inlined_call_operand.vmem [shape: bf16[4,32,8], index: 3, kind: input, shape index: {}]
  %s4 = inlined_call_operand.vmem [shape: bf16[4,32,8], index: 4, kind: input, shape index: {}]
  %s5 = inlined_call_operand.vmem [shape: bf16[4,8,32], index: 5, kind: input, shape index: {}]
  %s6 = inlined_call_operand.vmem [shape: f32[1,32], index: 6, kind: input, shape index: {}]
  %s7 = inlined_call_operand.hbm [shape: f32[2,16,32], index: 7, kind: output, shape index: {}]
  %s8 = sld [smem:[#allocation0]]
  $region77: #{tpu_custom_call.1} parent=0
    _
  %s10 = ssub.s32 1, %s8
  %s11 = scalar_select 0, %s10, %s8
  $region1: #{tpu_custom_call.1} parent=0
    #allocation7 [shape = 'u8[16384]{0}', space=vmem, size = 0x4000, scoped, tag = 'output window, operand 0']
    #allocation8 [shape = 's32[2]{0}', space=sflag, size = 0x8, scoped, tag = 'scoped memory for tpu_custom_call.1']
    %12 = vsyncpa [#allocation8], 0
    %s13 = scalar_lea.sflag [#allocation8], 1
    %14 = vsyncpa %s13, 0
    loop: start=0, step=1, limit=18
    $region2: #{tpu_custom_call.1} parent=1 // loop_pre_header
      _
    $region3: #{tpu_custom_call.1} parent=1 // loop_header
      %s16 = sphi 0, %s20
      %p17 = scmp.ge.s32.totalorder %s16, 18
      %s23 = sphi 0, %s42
      %s24 = sphi 0, %s38
      %s25 = sphi 0, %s34
      %s26 = sphi 0, %s23
      %s27 = sphi 0, %s24
      %s28 = sphi 0, %s25
      %s29 = sphi 0, %s26
      %s30 = sphi 0, %s27
      %s31 = sphi 0, %s28
      %s45 = sphi 0, %s47
      %s48 = sphi 0, %s45
      %s49 = sphi 0, %s48
      %s65 = sphi 0, %s49
      %s73 = sphi 0, %s75
      %s76 = sphi 0, %s73
      %s77 = sphi 0, %s76
      %s93 = sphi 0, %s77
      %s99 = sphi 0, %s101
      %s102 = sphi 0, %s99
      %s103 = sphi 0, %s102
      %s119 = sphi 0, %s103
      %s125 = sphi 0, %s127
      %s128 = sphi 0, %s125
      %s129 = sphi 0, %s128
      %s145 = sphi 0, %s129
      %s151 = sphi 0, %s153
      %s154 = sphi 0, %s151
      %s155 = sphi 0, %s154
      %s171 = sphi 0, %s155
      %s177 = sphi 0, %s179
      %s180 = sphi 0, %s177
      %s181 = sphi 0, %s180
      %s197 = sphi 0, %s181
      %s201 = sphi 0, %s201
      %s203 = sphi 0, %s201
      %s204 = sphi 0, %s203
      %s218 = sphi 0, %s204
      %s224 = sphi 0, %s226
      %s227 = sphi 0, %s224
      %s228 = sphi 0, %s227
      %s244 = sphi 0, %s228
    $region4: #{tpu_custom_call.1} parent=1 // loop_header_branch
      %19 = sbr.rel (%p17) target = $region8
    $region5: #{tpu_custom_call.1} parent=1 // loop_body
      %s21 = ssub.s32 %s16, 1
      %s22 = ssub.s32 %s16, 2
      %s32 = sadd.s32 1, %s25
      %p33 = scmp.ge.s32.totalorder %s32, 2
      %s34 = scalar_select %p33, 0, %s32
      %s35 = sadd.s32 1, %s24
      %s36 = scalar_select %p33, %s35, %s24
      %p37 = scmp.ge.s32.totalorder %s36, 4
      %s38 = scalar_select %p37, 0, %s36
      %s39 = sadd.s32 1, %s23
      %s40 = scalar_select %p37, %s39, %s23
      %p41 = scmp.ge.s32.totalorder %s40, 2
      %s42 = scalar_select %p41, 0, %s40
      %s43 = ssub.s32 %s23, %s42
      %p44 = scmp.eq.s32.totalorder %s43, 0
      %s46 = sadd.s32 %s45, 1
      %s47 = scalar_select %p44, %s45, %s46
      %p50 = pneg %p44
      %p51 = scmp.eq.s32.totalorder %s16, 15
      %p52 = por %p50, %p51
      %p53 = scmp.ne.s32.totalorder %s45, %s48
      %p54 = scmp.eq.s32.totalorder %s16, 0
      %p55 = por %p53, %p54
      %p56 = scmp.ne.s32.totalorder %s45, %s48
      %p57 = scmp.eq.s32.totalorder %s21, 15
      %p58 = por %p56, %p57
      %p59 = scmp.ne.s32.totalorder %s48, %s49
      %p60 = scmp.eq.s32.totalorder %s21, 0
      %p61 = por %p59, %p60
      %p62 = scmp.ne.s32.totalorder %s48, %s49
      %p63 = scmp.eq.s32.totalorder %s22, 15
      %p64 = por %p62, %p63
      %p66 = scmp.ne.s32.totalorder %s49, %s65
      %p67 = scmp.eq.s32.totalorder %s22, 0
      %p68 = por %p66, %p67
      %s69 = ssub.s32 %s23, %s42
      %s70 = ssub.s32 %s25, %s34
      %s71 = sor.u32 %s69, %s70
      %p72 = scmp.eq.s32.totalorder %s71, 0
      %s74 = sadd.s32 %s73, 1
      %s75 = scalar_select %p72, %s73, %s74
      %p78 = pneg %p72
      %p79 = scmp.eq.s32.totalorder %s16, 15
      %p80 = por %p78, %p79
      %p81 = scmp.ne.s32.totalorder %s73, %s76
      %p82 = scmp.eq.s32.totalorder %s16, 0
      %p83 = por %p81, %p82
      %p84 = scmp.ne.s32.totalorder %s73, %s76
      %p85 = scmp.eq.s32.totalorder %s21, 15
      %p86 = por %p84, %p85
      %p87 = scmp.ne.s32.totalorder %s76, %s77
      %p88 = scmp.eq.s32.totalorder %s21, 0
      %p89 = por %p87, %p88
      %p90 = scmp.ne.s32.totalorder %s76, %s77
      %p91 = scmp.eq.s32.totalorder %s22, 15
      %p92 = por %p90, %p91
      %p94 = scmp.ne.s32.totalorder %s77, %s93
      %p95 = scmp.eq.s32.totalorder %s22, 0
      %p96 = por %p94, %p95
      %s97 = ssub.s32 %s24, %s38
      %p98 = scmp.eq.s32.totalorder %s97, 0
      %s100 = sadd.s32 %s99, 1
      %s101 = scalar_select %p98, %s99, %s100
      %p104 = pneg %p98
      %p105 = scmp.eq.s32.totalorder %s16, 15
      %p106 = por %p104, %p105
      %p107 = scmp.ne.s32.totalorder %s99, %s102
      %p108 = scmp.eq.s32.totalorder %s16, 0
      %p109 = por %p107, %p108
      %p110 = scmp.ne.s32.totalorder %s99, %s102
      %p111 = scmp.eq.s32.totalorder %s21, 15
      %p112 = por %p110, %p111
      %p113 = scmp.ne.s32.totalorder %s102, %s103
      %p114 = scmp.eq.s32.totalorder %s21, 0
      %p115 = por %p113, %p114
      %p116 = scmp.ne.s32.totalorder %s102, %s103
      %p117 = scmp.eq.s32.totalorder %s22, 15
      %p118 = por %p116, %p117
      %p120 = scmp.ne.s32.totalorder %s103, %s119
      %p121 = scmp.eq.s32.totalorder %s22, 0
      %p122 = por %p120, %p121
      %s123 = ssub.s32 %s24, %s38
      %p124 = scmp.eq.s32.totalorder %s123, 0
      %s126 = sadd.s32 %s125, 1
      %s127 = scalar_select %p124, %s125, %s126
      %p130 = pneg %p124
      %p131 = scmp.eq.s32.totalorder %s16, 15
      %p132 = por %p130, %p131
      %p133 = scmp.ne.s32.totalorder %s125, %s128
      %p134 = scmp.eq.s32.totalorder %s16, 0
      %p135 = por %p133, %p134
      %p136 = scmp.ne.s32.totalorder %s125, %s128
      %p137 = scmp.eq.s32.totalorder %s21, 15
      %p138 = por %p136, %p137
      %p139 = scmp.ne.s32.totalorder %s128, %s129
      %p140 = scmp.eq.s32.totalorder %s21, 0
      %p141 = por %p139, %p140
      %p142 = scmp.ne.s32.totalorder %s128, %s129
      %p143 = scmp.eq.s32.totalorder %s22, 15
      %p144 = por %p142, %p143
      %p146 = scmp.ne.s32.totalorder %s129, %s145
      %p147 = scmp.eq.s32.totalorder %s22, 0
      %p148 = por %p146, %p147
      %s149 = ssub.s32 %s24, %s38
      %p150 = scmp.eq.s32.totalorder %s149, 0
      %s152 = sadd.s32 %s151, 1
      %s153 = scalar_select %p150, %s151, %s152
      %p156 = pneg %p150
      %p157 = scmp.eq.s32.totalorder %s16, 15
      %p158 = por %p156, %p157
      %p159 = scmp.ne.s32.totalorder %s151, %s154
      %p160 = scmp.eq.s32.totalorder %s16, 0
      %p161 = por %p159, %p160
      %p162 = scmp.ne.s32.totalorder %s151, %s154
      %p163 = scmp.eq.s32.totalorder %s21, 15
      %p164 = por %p162, %p163
      %p165 = scmp.ne.s32.totalorder %s154, %s155
      %p166 = scmp.eq.s32.totalorder %s21, 0
      %p167 = por %p165, %p166
      %p168 = scmp.ne.s32.totalorder %s154, %s155
      %p169 = scmp.eq.s32.totalorder %s22, 15
      %p170 = por %p168, %p169
      %p172 = scmp.ne.s32.totalorder %s155, %s171
      %p173 = scmp.eq.s32.totalorder %s22, 0
      %p174 = por %p172, %p173
      %s175 = ssub.s32 %s24, %s38
      %p176 = scmp.eq.s32.totalorder %s175, 0
      %s178 = sadd.s32 %s177, 1
      %s179 = scalar_select %p176, %s177, %s178
      %p182 = pneg %p176
      %p183 = scmp.eq.s32.totalorder %s16, 15
      %p184 = por %p182, %p183
      %p185 = scmp.ne.s32.totalorder %s177, %s180
      %p186 = scmp.eq.s32.totalorder %s16, 0
      %p187 = por %p185, %p186
      %p188 = scmp.ne.s32.totalorder %s177, %s180
      %p189 = scmp.eq.s32.totalorder %s21, 15
      %p190 = por %p188, %p189
      %p191 = scmp.ne.s32.totalorder %s180, %s181
      %p192 = scmp.eq.s32.totalorder %s21, 0
      %p193 = por %p191, %p192
      %p194 = scmp.ne.s32.totalorder %s180, %s181
      %p195 = scmp.eq.s32.totalorder %s22, 15
      %p196 = por %p194, %p195
      %p198 = scmp.ne.s32.totalorder %s181, %s197
      %p199 = scmp.eq.s32.totalorder %s22, 0
      %p200 = por %p198, %p199
      %s202 = sadd.s32 %s201, 1
      %p205 = scmp.eq.s32.totalorder %s16, 15
      %p206 = scmp.ne.s32.totalorder %s201, %s203
      %p207 = scmp.eq.s32.totalorder %s16, 0
      %p208 = por %p206, %p207
      %p209 = scmp.ne.s32.totalorder %s201, %s203
      %p210 = scmp.eq.s32.totalorder %s21, 15
      %p211 = por %p209, %p210
      %p212 = scmp.ne.s32.totalorder %s203, %s204
      %p213 = scmp.eq.s32.totalorder %s21, 0
      %p214 = por %p212, %p213
      %p215 = scmp.ne.s32.totalorder %s203, %s204
      %p216 = scmp.eq.s32.totalorder %s22, 15
      %p217 = por %p215, %p216
      %p219 = scmp.ne.s32.totalorder %s204, %s218
      %p220 = scmp.eq.s32.totalorder %s22, 0
      %p221 = por %p219, %p220
      %s222 = ssub.s32 %s23, %s42
      %p223 = scmp.eq.s32.totalorder %s222, 0
      %s225 = sadd.s32 %s224, 1
      %s226 = scalar_select %p223, %s224, %s225
      %p229 = pneg %p223
      %p230 = scmp.eq.s32.totalorder %s16, 15
      %p231 = por %p229, %p230
      %p232 = scmp.ne.s32.totalorder %s224, %s227
      %p233 = scmp.eq.s32.totalorder %s16, 0
      %p234 = por %p232, %p233
      %p235 = scmp.ne.s32.totalorder %s224, %s227
      %p236 = scmp.eq.s32.totalorder %s21, 15
      %p237 = por %p235, %p236
      %p238 = scmp.ne.s32.totalorder %s227, %s228
      %p239 = scmp.eq.s32.totalorder %s21, 0
      %p240 = por %p238, %p239
      %p241 = scmp.ne.s32.totalorder %s227, %s228
      %p242 = scmp.eq.s32.totalorder %s22, 15
      %p243 = por %p241, %p242
      %p245 = scmp.ne.s32.totalorder %s228, %s244
      %p246 = scmp.eq.s32.totalorder %s22, 0
      %p247 = por %p245, %p246
      %p248 = scmp.le.s32.totalorder 1, %s16
      %p249 = scmp.lt.s32.totalorder %s16, 17
      %p250 = pnand %p248, %p249
      %p251 = pneg %p250
      // Predicated region
      $region9: #{tpu_custom_call.1} parent=5 // pred_check
        _
      $region10: #{tpu_custom_call.1} parent=5 // pred_check_branch
        %253 = sbr.rel (%p250) target = $region12
      $region11: #{tpu_custom_call.1} parent=5 // pred_region
        %s254 = ssub.s32 %s16, 1
        // Predicated region
        $region13: #{tpu_custom_call.1} parent=11 // pred_check
          %p255 = pneg %p214
        $region14: #{tpu_custom_call.1} parent=11 // pred_check_branch
          %257 = sbr.rel (%p255) target = $region16
        $region15: #{tpu_custom_call.1} parent=11 // pred_region
          _
        $region16: #{tpu_custom_call.1} parent=11 // pred_fallthru
          _
      $region12: #{tpu_custom_call.1} parent=5 // pred_fallthru
        _
      %p258 = scmp.lt.s32.totalorder %s16, 16
      // Predicated region
      $region17: #{tpu_custom_call.1} parent=5 // pred_check
        %p259 = pneg %p258
      $region18: #{tpu_custom_call.1} parent=5 // pred_check_branch
        %261 = sbr.rel (%p259) target = $region20
      $region19: #{tpu_custom_call.1} parent=5 // pred_region
        // Predicated region
        $region21: #{tpu_custom_call.1} parent=19 // pred_check
          %p262 = pneg %p55
        $region22: #{tpu_custom_call.1} parent=19 // pred_check_branch
          %264 = sbr.rel (%p262) target = $region24
        $region23: #{tpu_custom_call.1} parent=19 // pred_region
          %p265 = scmp.lt.s32.totalorder %s23, 1
          %s266 = scalar_select %p265, %s23, 1
          %s267 = smul.addr %s266, 2
          %s268 = smul.addr %s267, 4
          %s269 = scalar_lea.vmem %s0, %s268
        $region24: #{tpu_custom_call.1} parent=19 // pred_fallthru
          _
        // Predicated region
        $region25: #{tpu_custom_call.1} parent=19 // pred_check
          %p270 = pneg %p83
        $region26: #{tpu_custom_call.1} parent=19 // pred_check_branch
          %272 = sbr.rel (%p270) target = $region28
        $region27: #{tpu_custom_call.1} parent=19 // pred_region
          %p273 = scmp.lt.s32.totalorder %s23, 1
          %s274 = scalar_select %p273, %s23, 1
          %p275 = scmp.lt.s32.totalorder %s25, 1
          %s276 = scalar_select %p275, %s25, 1
          %s277 = smul.addr %s274, 2
          %s278 = sadd.s32 %s276, %s277
          %s279 = smul.addr %s278, 4
          %s280 = scalar_lea.vmem %s1, %s279
        $region28: #{tpu_custom_call.1} parent=19 // pred_fallthru
          _
        // Predicated region
        $region29: #{tpu_custom_call.1} parent=19 // pred_check
          %p281 = pneg %p109
        $region30: #{tpu_custom_call.1} parent=19 // pred_check_branch
          %283 = sbr.rel (%p281) target = $region32
        $region31: #{tpu_custom_call.1} parent=19 // pred_region
          %p284 = scmp.lt.s32.totalorder %s24, 3
          %s285 = scalar_select %p284, %s24, 3
          %s286 = smul.addr %s285, 4
          %s287 = smul.addr %s286, 4
          %s288 = scalar_lea.vmem %s2, %s287
        $region32: #{tpu_custom_call.1} parent=19 // pred_fallthru
          _
        // Predicated region
        $region33: #{tpu_custom_call.1} parent=19 // pred_check
          %p289 = pneg %p135
        $region34: #{tpu_custom_call.1} parent=19 // pred_check_branch
          %291 = sbr.rel (%p289) target = $region36
        $region35: #{tpu_custom_call.1} parent=19 // pred_region
          %p292 = scmp.lt.s32.totalorder %s24, 3
          %s293 = scalar_select %p292, %s24, 3
          %s294 = smul.addr %s293, 4
          %s295 = smul.addr %s294, 4
          %s296 = scalar_lea.vmem %s3, %s295
        $region36: #{tpu_custom_call.1} parent=19 // pred_fallthru
          _
        // Predicated region
        $region37: #{tpu_custom_call.1} parent=19 // pred_check
          %p297 = pneg %p161
        $region38: #{tpu_custom_call.1} parent=19 // pred_check_branch
          %299 = sbr.rel (%p297) target = $region40
        $region39: #{tpu_custom_call.1} parent=19 // pred_region
          %p300 = scmp.lt.s32.totalorder %s24, 3
          %s301 = scalar_select %p300, %s24, 3
          %s302 = smul.addr %s301, 4
          %s303 = smul.addr %s302, 4
          %s304 = scalar_lea.vmem %s4, %s303
        $region40: #{tpu_custom_call.1} parent=19 // pred_fallthru
          _
        // Predicated region
        $region41: #{tpu_custom_call.1} parent=19 // pred_check
          %p305 = pneg %p187
        $region42: #{tpu_custom_call.1} parent=19 // pred_check_branch
          %307 = sbr.rel (%p305) target = $region44
        $region43: #{tpu_custom_call.1} parent=19 // pred_region
          %p308 = scmp.lt.s32.totalorder %s24, 3
          %s309 = scalar_select %p308, %s24, 3
          %s310 = smul.addr %s309, 4
          %s311 = scalar_lea.vmem %s5, %s310
        $region44: #{tpu_custom_call.1} parent=19 // pred_fallthru
          _
      $region20: #{tpu_custom_call.1} parent=5 // pred_fallthru
        _
      %p312 = scmp.le.s32.totalorder 1, %s16
      %p313 = scmp.lt.s32.totalorder %s16, 17
      %p314 = pnand %p312, %p313
      %p315 = pneg %p314
      // Predicated region
      $region45: #{tpu_custom_call.1} parent=5 // pred_check
        _
      $region46: #{tpu_custom_call.1} parent=5 // pred_check_branch
        %317 = sbr.rel (%p314) target = $region48
      $region47: #{tpu_custom_call.1} parent=5 // pred_region
        %s318 = ssub.s32 %s16, 1
        %p319 = scmp.lt.s32.totalorder %s26, 1
        %s320 = scalar_select %p319, %s26, 1
        %s321 = smul.addr %s320, 2
        %s322 = smul.addr %s321, 4
        %s323 = scalar_lea.vmem %s0, %s322
        %p324 = pneg %p61
        %p325 = pneg %p58
        %p326 = scmp.lt.s32.totalorder %s26, 1
        %s327 = scalar_select %p326, %s26, 1
        %p328 = scmp.lt.s32.totalorder %s28, 1
        %s329 = scalar_select %p328, %s28, 1
        %s330 = smul.addr %s327, 2
        %s331 = sadd.s32 %s329, %s330
        %s332 = smul.addr %s331, 4
        %s333 = scalar_lea.vmem %s1, %s332
        %p334 = pneg %p89
        %p335 = pneg %p86
        %p336 = scmp.lt.s32.totalorder %s27, 3
        %s337 = scalar_select %p336, %s27, 3
        %s338 = smul.addr %s337, 4
        %s339 = smul.addr %s338, 4
        %s340 = scalar_lea.vmem %s2, %s339
        %p341 = pneg %p115
        %p342 = pneg %p112
        %p343 = scmp.lt.s32.totalorder %s27, 3
        %s344 = scalar_select %p343, %s27, 3
        %s345 = smul.addr %s344, 4
        %s346 = smul.addr %s345, 4
        %s347 = scalar_lea.vmem %s3, %s346
        %p348 = pneg %p141
        %p349 = pneg %p138
        %p350 = scmp.lt.s32.totalorder %s27, 3
        %s351 = scalar_select %p350, %s27, 3
        %s352 = smul.addr %s351, 4
        %s353 = smul.addr %s352, 4
        %s354 = scalar_lea.vmem %s4, %s353
        %p355 = pneg %p167
        %p356 = pneg %p164
        %p357 = scmp.lt.s32.totalorder %s27, 3
        %s358 = scalar_select %p357, %s27, 3
        %s359 = smul.addr %s358, 4
        %s360 = scalar_lea.vmem %s5, %s359
        %p361 = pneg %p193
        %p362 = pneg %p190
        %p363 = pneg %p214
        %p364 = pneg %p211
        %p365 = pneg %p240
        %p366 = pneg %p237
        %s367 = sand.u32 %s227, 1
        %s368 = scalar_lea.sflag [#allocation8], %s367
        %s369 = sand.u32 %s227, 1
        %s370 = smul.addr %s369, 16
        %s371 = scalar_lea.vmem [#allocation7], %s370
        %p372 = scmp.lt.s32.totalorder %s26, 1
        %s373 = scalar_select %p372, %s26, 1
        %s374 = smul.addr %s373, 2
        %s375 = smul.addr %s374, 4
        %s376 = scalar_lea.vmem %s0, %s375
        %p377 = scmp.lt.s32.totalorder %s26, 1
        %s378 = scalar_select %p377, %s26, 1
        %p379 = scmp.lt.s32.totalorder %s28, 1
        %s380 = scalar_select %p379, %s28, 1
        %s381 = smul.addr %s378, 2
        %s382 = sadd.s32 %s380, %s381
        %s383 = smul.addr %s382, 4
        %s384 = scalar_lea.vmem %s1, %s383
        %p385 = scmp.lt.s32.totalorder %s27, 3
        %s386 = scalar_select %p385, %s27, 3
        %s387 = smul.addr %s386, 4
        %s388 = smul.addr %s387, 4
        %s389 = scalar_lea.vmem %s2, %s388
        %p390 = scmp.lt.s32.totalorder %s27, 3
        %s391 = scalar_select %p390, %s27, 3
        %s392 = smul.addr %s391, 4
        %s393 = smul.addr %s392, 4
        %s394 = scalar_lea.vmem %s3, %s393
        %p395 = scmp.lt.s32.totalorder %s27, 3
        %s396 = scalar_select %p395, %s27, 3
        %s397 = smul.addr %s396, 4
        %s398 = smul.addr %s397, 4
        %s399 = scalar_lea.vmem %s4, %s398
        %p400 = scmp.lt.s32.totalorder %s27, 3
        %s401 = scalar_select %p400, %s27, 3
        %s402 = smul.addr %s401, 4
        %s403 = scalar_lea.vmem %s5, %s402
        %p405 = scmp.eq.s32.totalorder %s27, 0
        %p406 = scmp.eq.s32.totalorder %s28, 0
        %p407 = pnand %p405, %p406
        %p408 = pneg %p407
        // Predicated region
        $region49: #{tpu_custom_call.1} parent=47 // pred_check
          _
        $region50: #{tpu_custom_call.1} parent=47 // pred_check_branch
          %410 = sbr.rel (%p407) target = $region52
        $region51: #{tpu_custom_call.1} parent=47 // pred_region
          %v411 = vld [vmem:[%s6] sm:$0x1]
          %v413 = vperm.slane %v411, 0
          %vm415 = vcmask 261120
          %416 = vst.msk [vmem:[#allocation6] sm:$0xff] %vm415, %v413
          %417 = vst.msk [vmem:[#allocation6 + $0x8] sm:$0xff] %vm415, %v413
        $region52: #{tpu_custom_call.1} parent=47 // pred_fallthru
          _
        // Predicated region
        $region53: #{tpu_custom_call.1} parent=47 // pred_check
          %p418 = pneg %p406
        $region54: #{tpu_custom_call.1} parent=47 // pred_check_branch
          %420 = sbr.rel (%p418) target = $region56
        $region55: #{tpu_custom_call.1} parent=47 // pred_region
          %v421 = vld [vmem:[%s376] sm:$0xf]
          %v422 = vld [vmem:[%s376 + $0x4] sm:$0xf]
          %v423 = vld [vmem:[%s389] sm:$0xf]
          %v424 = vld [vmem:[%s389 + $0x4] sm:$0xf]
          %v425 = vld [vmem:[%s389 + $0x8] sm:$0xf]
          %v426 = vld [vmem:[%s389 + $0xc] sm:$0xf]
          %v429 = vunpack.c.l.b16 %v421
          %v430 = vunpack.c.l.b16 %v422
          %v431 = vpack.c.b16 %v430, %v429
          %v436 = vunpack.c.l.b16 %v423
          %v437 = vunpack.c.l.b16 %v424
          %v438 = vunpack.c.l.b16 %v425
          %v439 = vunpack.c.l.b16 %v426
          %v440 = vpack.c.b16 %v437, %v436
          %v441 = vpack.c.b16 %v439, %v438
          %vm444 = vcmask 261120
          %v446 = vsel %vm444, %v431, 0
          %448 = vmatpush.bf16.msra.mxu0 0
          %449 = vmatpush.bf16.msra.mxu0 0
          %450 = vmatpush.bf16.msra.mxu0 0
          %451 = vmatpush.bf16.msra.mxu0 0
          %452 = vmatpush.bf16.msra.mxu0 0
          %453 = vmatpush.bf16.msra.mxu0 0
          %454 = vmatpush.bf16.msra.mxu0 %v441
          %455 = vmatpush.bf16.msra.mxu0 %v440
          %456 = vmatmul.bf16.gmra.mxu0 %v446
          %v457 = vpop.f32.mrf.mxu0
          %v458 = vadd.f32 0.0, %v457
          %v459 = vpop.f32.mrf.mxu0
          %v460 = vadd.f32 0.0, %v459
          %461 = vdwg.mxu0
          %v462 = vmul.f32 %v458, 0.17677669
          %v463 = vmul.f32 %v460, 0.17677669
          %v464 = vpack.c.bf16 %v462, %v462
          %v465 = vpack.c.bf16 %v463, %v463
          %vm466 = vcmask 60416
          %467 = vst.msk [vmem:[#allocation2] sm:$0xf] %vm466, %v464
          %468 = vst.msk [vmem:[#allocation2 + $0x4] sm:$0xf] %vm466, %v465
          %vm469 = vcmask 7168
          %470 = vst.msk [vmem:[#allocation3] sm:$0xff] %vm469, -inf
          %471 = vst.msk [vmem:[#allocation3 + $0x8] sm:$0xff] %vm469, -inf
          %472 = vst.msk [vmem:[#allocation4] sm:$0xff] %vm469, 0.0
          %473 = vst.msk [vmem:[#allocation4 + $0x8] sm:$0xff] %vm469, 0.0
          %vm474 = vcmask 64512
          %475 = vst.msk [vmem:[#allocation5] sm:$0xff] %vm474, 0.0
          %476 = vst.msk [vmem:[#allocation5 + $0x8] sm:$0xff] %vm474, 0.0
        $region56: #{tpu_custom_call.1} parent=47 // pred_fallthru
          _
        %v477 = vld [vmem:[%s384] sm:$0xf]
        %v478 = vld [vmem:[%s394] sm:$0xf]
        %v479 = vld [vmem:[%s394 + $0x4] sm:$0xf]
        %v480 = vld [vmem:[%s394 + $0x8] sm:$0xf]
        %v481 = vld [vmem:[%s394 + $0xc] sm:$0xf]
        %v486 = vunpack.c.l.b16 %v478
        %v487 = vunpack.c.l.b16 %v479
        %v488 = vunpack.c.l.b16 %v480
        %v489 = vunpack.c.l.b16 %v481
        %v490 = vpack.c.b16 %v487, %v486
        %v491 = vpack.c.b16 %v489, %v488
        %vm494 = vcmask 261120
        %v496 = vsel %vm494, %v477, 0
        %498 = vmatpush.bf16.msra.mxu0 0
        %499 = vmatpush.bf16.msra.mxu0 0
        %500 = vmatpush.bf16.msra.mxu0 0
        %501 = vmatpush.bf16.msra.mxu0 0
        %502 = vmatpush.bf16.msra.mxu0 0
        %503 = vmatpush.bf16.msra.mxu0 0
        %504 = vmatpush.bf16.msra.mxu0 %v491
        %505 = vmatpush.bf16.msra.mxu0 %v490
        %506 = vmatmul.bf16.gmra.mxu0 %v496
        %v507 = vpop.f32.mrf.mxu0
        %v508 = vadd.f32 0.0, %v507
        %v509 = vpop.f32.mrf.mxu0
        %510 = vdwg.mxu0
        %v511 = vld [vmem:[%s399] sm:$0xf]
        %v512 = vld [vmem:[%s399 + $0x4] sm:$0xf]
        %v513 = vld [vmem:[%s399 + $0x8] sm:$0xf]
        %v514 = vld [vmem:[%s399 + $0xc] sm:$0xf]
        %v519 = vunpack.c.l.b16 %v511
        %v520 = vunpack.c.l.b16 %v512
        %v521 = vunpack.c.l.b16 %v513
        %v522 = vunpack.c.l.b16 %v514
        %v523 = vpack.c.b16 %v520, %v519
        %v524 = vpack.c.b16 %v522, %v521
        %527 = vmatpush.bf16.msra.mxu0 0
        %528 = vmatpush.bf16.msra.mxu0 0
        %529 = vmatpush.bf16.msra.mxu0 0
        %530 = vmatpush.bf16.msra.mxu0 0
        %531 = vmatpush.bf16.msra.mxu0 0
        %532 = vmatpush.bf16.msra.mxu0 0
        %533 = vmatpush.bf16.msra.mxu0 %v524
        %534 = vmatpush.bf16.msra.mxu0 %v523
        %535 = vmatmul.bf16.gmra.mxu0 %v496
        %v536 = vpop.f32.mrf.mxu0
        %v537 = vadd.f32 0.0, %v536
        %v538 = vpop.f32.mrf.mxu0
        %539 = vdwg.mxu0
        %v540 = vld [vmem:[#allocation2] sm:$0xf]
        %v541 = vld [vmem:[#allocation2 + $0x4] sm:$0xf]
        %v542 = vpack.c.bf16 %v508, %v508
        %v545 = vunpack.c.l.b16 %v540
        %v546 = vunpack.c.l.b16 %v541
        %v547 = vpack.c.b16 %v546, %v545
        %vm548 = vcmask 64512
        %v550 = vsel %vm548, %v547, 0
        %v553 = vsel %vm548, %v542, 0
        %555 = vmatpush.bf16.xpose.msra.mxu0 0
        %556 = vmatpush.bf16.xpose.msra.mxu0 0
        %557 = vmatpush.bf16.xpose.msra.mxu0 0
        %558 = vmatpush.bf16.xpose.msra.mxu0 0
        %559 = vmatpush.bf16.xpose.msra.mxu0 0
        %560 = vmatpush.bf16.xpose.msra.mxu0 0
        %561 = vmatpush.bf16.xpose.msra.mxu0 0
        %562 = vmatpush.bf16.xpose.msra.mxu0 %v553
        %563 = vmatmul.bf16.gmra.mxu0 %v550
        %v564 = vpop.f32.mrf.mxu0
        %v565 = vadd.f32 0.0, %v564
        %v566 = vpop.f32.mrf.mxu0
        %v567 = vadd.f32 0.0, %v566
        %568 = vdwg.mxu0
        %v569 = vlaneseq
        %v570 = vshrl.u32 %v569, 7
        %v571 = vadd.s32 %v570, 8
        %v572 = vlaneseq
        %v573 = vand.u32 %v572, 127
        %s574 = smul.u32 %s28, 8
        %v575 = vstv %s574
        %v576 = vadd.s32 %v573, %v575
        %vm577 = vcmp.le.s32.totalorder %v576, %v570
        %vm578 = vcmp.le.s32.totalorder %v576, %v571
        %v579 = vsel %vm577, %v565, -1e+30
        %v580 = vsel %vm578, %v567, -1e+30
        %v581 = vld [vmem:[#allocation3] sm:$0xff]
        %v582 = vld [vmem:[#allocation3 + $0x8] sm:$0xff]
        %v583 = vsel %vm548, %v579, -inf
        %584 = vmax.xlane.f32.xlu0 %v583
        %v585 = vpop.xlane.xlu0 %584
        %v586 = vsel %vm548, %v580, -inf
        %587 = vmax.xlane.f32.xlu0 %v586
        %v588 = vpop.xlane.xlu0 %587
        %v589 = vmax.f32 %v581, %v585
        %v590 = vmax.f32 %v582, %v588
        %v591 = vsub.f32 %v581, %v589
        %v592 = vsub.f32 %v582, %v590
        %v593 = vmul.f32 %v591, 1.442695
        %v594 = vpow.pop %v593
        %v595 = vmul.f32 %v592, 1.442695
        %v596 = vpow.pop %v595
        %598 = vset.pattern.permute.xlu0 0
        %599 = vperm.xlu0 %598, %v589
        %v600 = vpop.permute.xlu0 %599
        %603 = vset.pattern.permute.xlu0 0
        %604 = vperm.xlu0 %603, %v590
        %v605 = vpop.permute.xlu0 %604
        %v607 = vsub.f32 %v579, %v600
        %v608 = vsub.f32 %v580, %v605
        %v609 = vmul.f32 %v607, 1.442695
        %v610 = vpow.pop %v609
        %v611 = vmul.f32 %v608, 1.442695
        %v612 = vpow.pop %v611
        %v613 = vld [vmem:[#allocation4] sm:$0xff]
        %v614 = vld [vmem:[#allocation4 + $0x8] sm:$0xff]
        %v615 = vmul.f32 %v594, %v613
        %v616 = vmul.f32 %v596, %v614
        %v617 = vsel %vm548, %v610, 0.0
        %618 = vadd.xlane.f32.xlu0 %v617
        %v619 = vpop.xlane.xlu0 %618
        %v620 = vsel %vm548, %v612, 0.0
        %621 = vadd.xlane.f32.xlu0 %v620
        %v622 = vpop.xlane.xlu0 %621
        %v623 = vadd.f32 %v615, %v619
        %v624 = vadd.f32 %v616, %v622
        %vm625 = vcmask 7168
        %626 = vst.msk [vmem:[#allocation4] sm:$0xff] %vm625, %v623
        %627 = vst.msk [vmem:[#allocation4 + $0x8] sm:$0xff] %vm625, %v624
        %v628 = vld [vmem:[#allocation5] sm:$0xff]
        %v629 = vld [vmem:[#allocation5 + $0x8] sm:$0xff]
        %631 = vset.pattern.permute.xlu0 0
        %632 = vperm.xlu0 %631, %v594
        %v633 = vpop.permute.xlu0 %632
        %636 = vset.pattern.permute.xlu0 0
        %637 = vperm.xlu0 %636, %v596
        %v638 = vpop.permute.xlu0 %637
        %v640 = vmul.f32 %v633, %v628
        %v641 = vmul.f32 %v638, %v629
        %v642 = vpack.c.bf16 %v612, %v610
        %v643 = vpack.c.bf16 %v537, %v537
        %v645 = vsel %vm548, %v642, 0
        %vm647 = vcmask 1043456
        %v649 = vsel %vm647, %v643, 0
        %651 = vmatpush.bf16.msra.mxu0 0
        %652 = vmatpush.bf16.msra.mxu0 0
        %653 = vmatpush.bf16.msra.mxu0 0
        %654 = vmatpush.bf16.msra.mxu0 0
        %655 = vmatpush.bf16.msra.mxu0 0
        %656 = vmatpush.bf16.msra.mxu0 0
        %657 = vmatpush.bf16.msra.mxu0 0
        %658 = vmatpush.bf16.msra.mxu0 %v649
        %659 = vmatmul.bf16.gmra.mxu0 %v645
        %v660 = vpop.f32.mrf.mxu0
        %v661 = vadd.f32 0.0, %v660
        %v662 = vpop.f32.mrf.mxu0
        %v663 = vadd.f32 0.0, %v662
        %664 = vdwg.mxu0
        %v665 = vadd.f32 %v640, %v661
        %v666 = vadd.f32 %v641, %v663
        %667 = vst.msk [vmem:[#allocation5] sm:$0xff] %vm548, %v665
        %668 = vst.msk [vmem:[#allocation5 + $0x8] sm:$0xff] %vm548, %v666
        %669 = vst.msk [vmem:[#allocation3] sm:$0xff] %vm625, %v589
        %670 = vst.msk [vmem:[#allocation3 + $0x8] sm:$0xff] %vm625, %v590
        %p671 = scmp.eq.s32.totalorder %s28, 1
        // Predicated region
        $region57: #{tpu_custom_call.1} parent=47 // pred_check
          %p672 = pneg %p671
        $region58: #{tpu_custom_call.1} parent=47 // pred_check_branch
          %674 = sbr.rel (%p672) target = $region60
        $region59: #{tpu_custom_call.1} parent=47 // pred_region
          %v675 = vld [vmem:[#allocation4] sm:$0xff]
          %v676 = vld [vmem:[#allocation4 + $0x8] sm:$0xff]
          %v677 = vrcp.pop %v675
          %v678 = vrcp.pop %v676
          %v679 = vld [vmem:[#allocation5] sm:$0xff]
          %v680 = vld [vmem:[#allocation5 + $0x8] sm:$0xff]
          %682 = vset.pattern.permute.xlu0 0
          %683 = vperm.xlu0 %682, %v677
          %v684 = vpop.permute.xlu0 %683
          %687 = vset.pattern.permute.xlu0 0
          %688 = vperm.xlu0 %687, %v678
          %v689 = vpop.permute.xlu0 %688
          %v691 = vmul.f32 %v679, %v684
          %v692 = vmul.f32 %v680, %v689
          %v693 = vpack.c.bf16 %v692, %v691
          %v694 = vld [vmem:[#allocation6] sm:$0xff]
          %v695 = vld [vmem:[#allocation6 + $0x8] sm:$0xff]
          %v696 = vld [vmem:[%s403] sm:$0xf]
          %v698 = vsel %vm548, %v693, 0
          %v701 = vsel %vm647, %v696, 0
          %703 = vmatpush.bf16.msra.mxu0 0
          %704 = vmatpush.bf16.msra.mxu0 0
          %705 = vmatpush.bf16.msra.mxu0 0
          %706 = vmatpush.bf16.msra.mxu0 0
          %707 = vmatpush.bf16.msra.mxu0 0
          %708 = vmatpush.bf16.msra.mxu0 0
          %709 = vmatpush.bf16.msra.mxu0 0
          %710 = vmatpush.bf16.msra.mxu0 %v701
          %711 = vmatmul.bf16.gmra.mxu0 %v698
          %v712 = vpop.f32.mrf.mxu0
          %v713 = vadd.f32 0.0, %v712
          %v714 = vpop.f32.mrf.mxu0
          %v715 = vadd.f32 0.0, %v714
          %716 = vdwg.mxu0
          %v717 = vadd.f32 %v694, %v713
          %v718 = vadd.f32 %v695, %v715
          %719 = vst.msk [vmem:[#allocation6] sm:$0xff] %vm494, %v717
          %720 = vst.msk [vmem:[#allocation6 + $0x8] sm:$0xff] %vm494, %v718
          %p721 = scmp.eq.s32.totalorder %s27, 3
          // Predicated region
          $region61: #{tpu_custom_call.1} parent=59 // pred_check
            %p722 = pneg %p721
          $region62: #{tpu_custom_call.1} parent=59 // pred_check_branch
            %724 = sbr.rel (%p722) target = $region64
          $region63: #{tpu_custom_call.1} parent=59 // pred_region
            %v725 = vld [vmem:[#allocation6] sm:$0xff]
            %v726 = vld [vmem:[#allocation6 + $0x8] sm:$0xff]
            %727 = vst.msk [vmem:[%s371] sm:$0xff] %vm494, %v725
            %728 = vst.msk [vmem:[%s371 + $0x8] sm:$0xff] %vm494, %v726
          $region64: #{tpu_custom_call.1} parent=59 // pred_fallthru
            _
        $region60: #{tpu_custom_call.1} parent=47 // pred_fallthru
          _
        %s729 = sand.u32 %s227, 1
        %s730 = scalar_lea.sflag [#allocation8], %s729
        %s731 = sand.u32 %s227, 1
        %s732 = smul.addr %s731, 16
        %s733 = scalar_lea.vmem [#allocation7], %s732
        // Predicated region
        $region65: #{tpu_custom_call.1} parent=47 // pred_check
          %p734 = pneg %p237
        $region66: #{tpu_custom_call.1} parent=47 // pred_check_branch
          %736 = sbr.rel (%p734) target = $region68
        $region67: #{tpu_custom_call.1} parent=47 // pred_region
          %738 = vsyncadd %s730, 0
          %s739 = smul.addr %s26, 2
          %s740 = smul.addr %s739, 8
          %s741 = scalar_lea.hbm %s7, %s740
          %s742 = sshll.u32 %s733, 4
          %s743 = int_to_ptr.vmem [resolvable:$true] %s742
          %s744 = sshll.u32 %s741, 4
          %s745 = int_to_ptr.hbm [resolvable:$true] %s744
          %750 = dma.vmem_to_hbm [thread:$0]  %s743, 256, %s745, %s730, 128, 128, 8
        $region68: #{tpu_custom_call.1} parent=47 // pred_fallthru
          _
      $region48: #{tpu_custom_call.1} parent=5 // pred_fallthru
        _
      %p751 = scmp.le.s32.totalorder 2, %s16
      // Predicated region
      $region69: #{tpu_custom_call.1} parent=5 // pred_check
        %p752 = pneg %p751
      $region70: #{tpu_custom_call.1} parent=5 // pred_check_branch
        %754 = sbr.rel (%p752) target = $region72
      $region71: #{tpu_custom_call.1} parent=5 // pred_region
        %s755 = ssub.s32 %s16, 2
        // Predicated region
        $region73: #{tpu_custom_call.1} parent=71 // pred_check
          %p756 = pneg %p243
        $region74: #{tpu_custom_call.1} parent=71 // pred_check_branch
          %758 = sbr.rel (%p756) target = $region76
        $region75: #{tpu_custom_call.1} parent=71 // pred_region
          %s759 = sand.u32 %s228, 1
          %s760 = scalar_lea.sflag [#allocation8], %s759
          %s761 = sand.u32 %s228, 1
          %s762 = smul.addr %s761, 16
          %s763 = scalar_lea.vmem [#allocation7], %s762
          %765 = dma.done %s760, 256
        $region76: #{tpu_custom_call.1} parent=71 // pred_fallthru
          _
      $region72: #{tpu_custom_call.1} parent=5 // pred_fallthru
        _
    $region6: #{tpu_custom_call.1} parent=1 // loop_footer
      %s20 = sadd.s32 1, %s16
    $region7: #{tpu_custom_call.1} parent=1 // loop_footer_branch
      %15 = sbr.rel target = $region3
    $region8: #{tpu_custom_call.1} parent=1 // loop_exit
      _
    %766 = vsyncpa [#allocation8], 1
    %s767 = scalar_lea.sflag [#allocation8], 1
    %768 = vsyncpa %s767, 1

</llo_original>
